<compile_context>
chip_gen: v7x
topology: tpu7x:2x2x1
jax: 0.10.0
libtpu: 0.0.40
codegen_flags: <defaults>
</compile_context>

<pallas_src>
import functools

import jax
import jax.numpy as jnp
from jax import lax
from jax.experimental import pallas as pl
from jax.experimental.pallas import tpu as pltpu


def _round_up(x, m):
    return ((x + m - 1) // m) * m


def _cdiv(a, b):
    return (a + b - 1) // b


def _pick_vmem_limit():
    # v5e/v6e have 128 MiB physical VMEM -> allow ~96 MiB scoped.
    # v7x (64 MiB per TensorCore) and unknown chips -> stay conservative at 48 MiB.
    try:
        kind = jax.devices()[0].device_kind.lower()
    except Exception:
        kind = ""
    if ("v5" in kind) or ("v6" in kind):
        return 96 * 1024 * 1024
    return 48 * 1024 * 1024


# --------------------------- Phase 1: input projection ---------------------------
def _gi_projection_kernel(x_ref, w_ih_ref, b_gi_ref, gi_ref):
    # x_ref: (R, I) f32 -> bf16 cast done here (VPU work hidden under the matmul,
    # avoids a separate wrapper pass over x).
    x = x_ref[...].astype(jnp.bfloat16)
    acc = jnp.dot(x, w_ih_ref[...], preferred_element_type=jnp.float32) + b_gi_ref[...]
    gi_ref[...] = acc.astype(gi_ref.dtype)     # bf16 store: halves gi HBM traffic


# --------------------- Phase 2: recurrence + fused ReLU/Linear --------------------
def _gru_recurrence_kernel(gi_ref, w_hh_ref, b_hn_ref, w_fc_ref, b_fc_ref,
                           out_ref, h_ref, *, seq_len, time_padded, unroll):
    # gi_ref : (Tc, Bb, 3*Hp) bf16  time-major precomputed input projection
    # w_hh_ref: (Hp, 3*Hp) bf16 ; b_hn_ref: (1, Hp) f32
    # w_fc_ref: (Hp, Op) f32    ; b_fc_ref: (1, Op) f32
    # out_ref : (Bb, Op) f32    ; h_ref: (Bb, Hp) f32 VMEM scratch carried over chunks
    c = pl.program_id(1)
    n_chunks = pl.num_programs(1)
    Tc, Bb, _ = gi_ref.shape
    Hp = w_hh_ref.shape[0]

    @pl.when(c == 0)
    def _init():
        h_ref[...] = jnp.zeros_like(h_ref)

    w_hh = w_hh_ref[...]                                   # resident (Hp, 3Hp) bf16
    b_hn = jnp.broadcast_to(b_hn_ref[...], (Bb, Hp))       # hoisted broadcast (f32)

    def step(k, h):
        # Time-major layout: gi_ref[k] is a contiguous (Bb, 3Hp) view (no per-step
        # cross-sublane gather inside the serial dependency chain).
        gi_t = gi_ref[k].astype(jnp.float32)
        gh = jnp.dot(h.astype(jnp.bfloat16), w_hh,
                     preferred_element_type=jnp.float32)   # (Bb, 3Hp) f32
        # Gate slices land on 128-lane boundaries (Hp is a multiple of 128).
        r = jax.nn.sigmoid(gi_t[:, 0:Hp] + gh[:, 0:Hp])
        z = jax.nn.sigmoid(gi_t[:, Hp:2 * Hp] + gh[:, Hp:2 * Hp])
        n = jnp.tanh(gi_t[:, 2 * Hp:] + r * (gh[:, 2 * Hp:] + b_hn))
        h_new = (1.0 - z) * n + z * h
        if time_padded:                                    # only emitted if T was padded
            h_new = jnp.where(c * Tc + k < seq_len, h_new, h)
        return h_new
        # TODO(synk): on v6e/v7x the sigmoid/tanh could run in bf16 (bf16 EUP) if the
        # recurrence ever becomes EUP-bound; kept f32 for v5e compatibility/accuracy.

    h = lax.fori_loop(0, Tc, step, h_ref[...], unroll=unroll)
    h_ref[...] = h

    @pl.when(c == n_chunks - 1)
    def _finalize():
        h_relu = jnp.maximum(h, 0.0)
        out_ref[...] = (
            jnp.dot(h_relu, w_fc_ref[...], preferred_element_type=jnp.float32)
            + b_fc_ref[...]
        ).astype(out_ref.dtype)


# ------------------------------- parameter packing --------------------------------
def _pack_params(params, input_size, hidden_size, output_size):
    H, I, O = hidden_size, input_size, output_size
    Hp = _round_up(H, 128)
    Op = _round_up(O, 128)
    G = 3 * Hp

    w_ih, w_hh = params["w_ih"], params["w_hh"]     # (3H, I), (3H, H)  torch layout [r,z,n]
    b_ih, b_hh = params["b_ih"], params["b_hh"]     # (3H,), (3H,)
    w_fc, b_fc = params["w_fc"], params["b_fc"]     # (O, H), (O,)

    w_ih_p = jnp.zeros((I, G), jnp.float32)
    w_hh_p = jnp.zeros((Hp, G), jnp.float32)
    b_gi_p = jnp.zeros((1, G), jnp.float32)
    for g in range(3):
        w_ih_p = w_ih_p.at[:, g * Hp:g * Hp + H].set(w_ih[g * H:(g + 1) * H, :].T)
        w_hh_p = w_hh_p.at[:H, g * Hp:g * Hp + H].set(w_hh[g * H:(g + 1) * H, :].T)
    # Fold b_hr/b_hz into the input-projection bias (exact); b_hn must stay inside the
    # r * (W_hn h + b_hn) term, so it is passed separately to the recurrence kernel.
    b_gi_p = b_gi_p.at[0, 0 * Hp:0 * Hp + H].set(b_ih[0:H] + b_hh[0:H])
    b_gi_p = b_gi_p.at[0, 1 * Hp:1 * Hp + H].set(b_ih[H:2 * H] + b_hh[H:2 * H])
    b_gi_p = b_gi_p.at[0, 2 * Hp:2 * Hp + H].set(b_ih[2 * H:3 * H])
    b_hn_p = jnp.zeros((1, Hp), jnp.float32).at[0, :H].set(b_hh[2 * H:3 * H])

    w_fc_p = jnp.zeros((Hp, Op), jnp.float32).at[:H, :O].set(w_fc.T)
    b_fc_p = jnp.zeros((1, Op), jnp.float32).at[0, :O].set(b_fc)

    return {
        "w_ih": w_ih_p.astype(jnp.bfloat16),   # bf16 MXU operand
        "w_hh": w_hh_p.astype(jnp.bfloat16),   # bf16 MXU operand
        "b_gi": b_gi_p,                        # f32
        "b_hn": b_hn_p,                        # f32
        "w_fc": w_fc_p,                        # f32 (runs once; keep full precision)
        "b_fc": b_fc_p,                        # f32
    }


# ------------------------------------ wrapper --------------------------------------
def gru_model_forward(x, params, hidden_size):
    """x: (B, T, I) float32, batch_first like the PyTorch module. Returns (B, O)."""
    B, T, I = x.shape
    H = hidden_size
    O = params["b_fc"].shape[0]

    Hp = _round_up(H, 128)
    Op = _round_up(O, 128)
    G = 3 * Hp

    vmem_limit = _pick_vmem_limit()

    # ---- tile-size selection -------------------------------------------------------
    # Batch block Bb fills the MXU M dimension (<=256 rows). For large batches this
    # automatically yields n_b >= 2 parallel blocks so v7x's two TensorCores both work.
    B8 = _round_up(max(B, 1), 8)
    n_b = _cdiv(B8, 256)
    Bb = B8 if n_b == 1 else _round_up(_cdiv(B8, n_b), 16)

    # Time chunk: amortize the ~0.35us per-grid-step overhead over up to 32 steps.
    if T <= 8:
        Tc = 8
    elif T <= 16:
        Tc = 16
    else:
        Tc = 32

    def _phase2_vmem_bytes(bb, tc):
        gi_buf = 2 * tc * bb * G * 2                        # double-buffered bf16 gi chunk
        weights = 2 * (Hp * G * 2 + Hp * Op * 4 + G * 4 + Hp * 4 + Op * 4)
        io_buf = 2 * bb * Op * 4 + bb * Hp * 4              # out buffers + h scratch
        return gi_buf + weights + io_buf

    while _phase2_vmem_bytes(Bb, Tc) > vmem_limit and Tc > 8:
        Tc //= 2                                            # shrink Tc before Bb
    while _phase2_vmem_bytes(Bb, Tc) > vmem_limit and Bb > 16:
        Bb = max(16, (Bb // 2) // 16 * 16)
        n_b = _cdiv(B8, Bb)

    Bp = n_b * Bb
    n_c = _cdiv(T, Tc)
    Tp = n_c * Tc

    packed = _pack_params(params, I, H, O)

    # Time-major padded input (one cheap pass over x; I is tiny so this is ~1% of the
    # gi traffic). The bf16 cast happens inside the projection kernel.
    x_tm = jnp.zeros((Tp, Bp, I), jnp.float32).at[:T, :B, :].set(
        jnp.transpose(x.astype(jnp.float32), (1, 0, 2)))
    x2d = x_tm.reshape(Tp * Bp, I)              # free (layout-preserving) collapse

    # ---- Phase 1: input projection for all timesteps (parallel, pipelined) ----------
    rows_total = Tp * Bp
    rpb = min(1024, rows_total)                 # big row blocks -> near HBM roofline

    def _phase1_vmem_bytes(r):
        return 2 * (r * I * 4 + r * G * 2) + 2 * (I * G * 2 + G * 4)

    while _phase1_vmem_bytes(rpb) > vmem_limit and rpb > 16:
        rpb = max(16, (rpb // 2) // 16 * 16)
    n_row_blocks = _cdiv(rows_total, rpb)       # partial last block handled by Pallas

    gi2d = pl.pallas_call(
        _gi_projection_kernel,
        out_shape=jax.ShapeDtypeStruct((rows_total, G), jnp.bfloat16),
        grid=(n_row_blocks,),
        in_specs=[
            pl.BlockSpec((rpb, I), lambda r: (r, 0)),
            pl.BlockSpec((I, G), lambda r: (0, 0)),
            pl.BlockSpec((1, G), lambda r: (0, 0)),
        ],
        out_specs=pl.BlockSpec((rpb, G), lambda r: (r, 0)),
        compiler_params=pltpu.CompilerParams(
            dimension_semantics=("parallel",),
            vmem_limit_bytes=vmem_limit),
    )(x2d, packed["w_ih"], packed["b_gi"])
    gi = gi2d.reshape(Tp, Bp, G)                # free reshape: time-major (Tp, Bp, 3Hp)

    # ---- Phase 2: sequential recurrence + fused ReLU/Linear -------------------------
    kernel = functools.partial(
        _gru_recurrence_kernel,
        seq_len=T, time_padded=(Tp != T), unroll=min(8, Tc))
    out_p = pl.pallas_call(
        kernel,
        out_shape=jax.ShapeDtypeStruct((Bp, Op), jnp.float32),
        grid=(n_b, n_c),
        in_specs=[
            pl.BlockSpec((Tc, Bb, G), lambda b, c: (c, b, 0)),    # streamed time-major gi
            pl.BlockSpec((Hp, G), lambda b, c: (0, 0)),           # resident weights/biases
            pl.BlockSpec((1, Hp), lambda b, c: (0, 0)),
            pl.BlockSpec((Hp, Op), lambda b, c: (0, 0)),
            pl.BlockSpec((1, Op), lambda b, c: (0, 0)),
        ],
        out_specs=pl.BlockSpec((Bb, Op), lambda b, c: (b, 0)),
        scratch_shapes=[pltpu.VMEM((Bb, Hp), jnp.float32)],       # carried hidden state
        compiler_params=pltpu.CompilerParams(
            dimension_semantics=("parallel", "arbitrary"),        # batch-parallel / time-serial
            vmem_limit_bytes=vmem_limit),
    )(gi, packed["w_hh"], packed["b_hn"], packed["w_fc"], packed["b_fc"])

    return out_p[:B, :O]


# ---------------------------- init & pure-JAX reference ----------------------------
def init_params(key, input_size, hidden_size, output_size):
    """Parameters in the same layout PyTorch stores them (gate order [r, z, n])."""
    k = 1.0 / jnp.sqrt(hidden_size)
    keys = jax.random.split(key, 6)
    return {
        "w_ih": jax.random.uniform(keys[0], (3 * hidden_size, input_size),
                                   minval=-k, maxval=k, dtype=jnp.float32),
        "w_hh": jax.random.uniform(keys[1], (3 * hidden_size, hidden_size),
                                   minval=-k, maxval=k, dtype=jnp.float32),
        "b_ih": jax.random.uniform(keys[2], (3 * hidden_size,),
                                   minval=-k, maxval=k, dtype=jnp.float32),
        "b_hh": jax.random.uniform(keys[3], (3 * hidden_size,),
                                   minval=-k, maxval=k, dtype=jnp.float32),
        "w_fc": jax.random.uniform(keys[4], (output_size, hidden_size),
                                   minval=-k, maxval=k, dtype=jnp.float32),
        "b_fc": jax.random.uniform(keys[5], (output_size,),
                                   minval=-k, maxval=k, dtype=jnp.float32),
    }


def reference_forward(x, params, hidden_size):
    """Pure-JAX f32 reference of the PyTorch forward (for sanity checking)."""
    B, T, _ = x.shape
    H = hidden_size
    h = jnp.zeros((B, H), dtype=jnp.float32)
    for t in range(T):
        gi = x[:, t, :] @ params["w_ih"].T + params["b_ih"]
        gh = h @ params["w_hh"].T + params["b_hh"]
        r = jax.nn.sigmoid(gi[:, 0:H] + gh[:, 0:H])
        z = jax.nn.sigmoid(gi[:, H:2 * H] + gh[:, H:2 * H])
        n = jnp.tanh(gi[:, 2 * H:] + r * gh[:, 2 * H:])
        h = (1.0 - z) * n + z * h
    return jnp.maximum(h, 0.0) @ params["w_fc"].T + params["b_fc"]


if __name__ == "__main__":
    B, T, input_size, hidden_size, output_size = 2, 8, 4, 32, 8

    key = jax.random.PRNGKey(0)
    kx, kp = jax.random.split(key)
    x = jax.random.normal(kx, (B, T, input_size), dtype=jnp.float32)
    params = init_params(kp, input_size, hidden_size, output_size)

    out = gru_model_forward(x, params, hidden_size)
    out = jax.block_until_ready(out)

    ref = reference_forward(x, params, hidden_size)
    assert out.shape == (B, output_size)
    # Kernel uses bf16 MXU operands and bf16 gi storage (f32 accumulate / f32 gate math).
    assert jnp.allclose(out, ref, atol=4e-2, rtol=4e-2), (
        f"max abs err {jnp.max(jnp.abs(out - ref))}")

    print("KERNEL_OK")
</pallas_src>

<mosaic_0001>
module attributes {stable_mosaic.version = 11 : i64} {
  func.func @_gi_projection_kernel(%arg0: i32, %arg1: memref<64x4xf32, #tpu.memory_space<vmem>>, %arg2: memref<4x384xbf16, #tpu.memory_space<vmem>>, %arg3: memref<1x384xf32, #tpu.memory_space<vmem>>, %arg4: memref<64x384xbf16, #tpu.memory_space<vmem>>) attributes {dimension_semantics = [#tpu.dimension_semantics<parallel>], iteration_bounds = array<i64: 1>, scalar_prefetch = 0 : i64, scratch_operands = 0 : i64, tpu.core_type = #tpu.core_type<tc>, window_params = [{transform_indices = @transform_0, window_bounds = array<i64: 64, 4>}, {pipeline_mode = #tpu.pipeline_mode<synchronous>, transform_indices = @transform_1, window_bounds = array<i64: 4, 384>}, {pipeline_mode = #tpu.pipeline_mode<synchronous>, transform_indices = @transform_2, window_bounds = array<i64: 1, 384>}, {transform_indices = @transform_3, window_bounds = array<i64: 64, 384>}]} {
    %c0 = arith.constant 0 : index
    %c0_0 = arith.constant 0 : index
    %0 = vector.load %arg1[%c0, %c0_0] : memref<64x4xf32, #tpu.memory_space<vmem>>, vector<64x4xf32>
    %1 = arith.truncf %0 : vector<64x4xf32> to vector<64x4xbf16>
    %c0_1 = arith.constant 0 : index
    %c0_2 = arith.constant 0 : index
    %2 = vector.load %arg2[%c0_1, %c0_2] : memref<4x384xbf16, #tpu.memory_space<vmem>>, vector<4x384xbf16>
    %cst = arith.constant dense<0.000000e+00> : vector<64x384xf32>
    %3 = tpu.matmul %1, %2, %cst {dimension_numbers = #tpu.dot_dimension_numbers<[1], [0], [0], [1], [0, 0, 1, 1], [], []>} : vector<64x4xbf16>, vector<4x384xbf16>, vector<64x384xf32> -> vector<64x384xf32>
    %c0_3 = arith.constant 0 : index
    %c0_4 = arith.constant 0 : index
    %4 = vector.load %arg3[%c0_3, %c0_4] : memref<1x384xf32, #tpu.memory_space<vmem>>, vector<1x384xf32>
    %5 = vector.broadcast %4 : vector<1x384xf32> to vector<64x384xf32>
    %6 = arith.addf %3, %5 : vector<64x384xf32>
    %7 = arith.truncf %6 : vector<64x384xf32> to vector<64x384xbf16>
    %c0_5 = arith.constant 0 : index
    %c0_6 = arith.constant 0 : index
    %8 = vector.load %arg4[%c0_5, %c0_6] : memref<64x384xbf16, #tpu.memory_space<vmem>>, vector<64x384xbf16>
    tpu.vector_store %arg4[%c0_5, %c0_6], %7 {strides = array<i32>} : memref<64x384xbf16, #tpu.memory_space<vmem>>, vector<64x384xbf16>,
    return
  }
  func.func @transform_0(%arg0: i32) -> (i32, i32) {
    %c0_i32 = arith.constant 0 : i32
    %c0_i32_0 = arith.constant 0 : i32
    return %arg0, %c0_i32 : i32, i32
  }
  func.func @transform_1(%arg0: i32) -> (i32, i32) {
    %c0_i32 = arith.constant 0 : i32
    %c0_i32_0 = arith.constant 0 : i32
    %c0_i32_1 = arith.constant 0 : i32
    return %c0_i32, %c0_i32_0 : i32, i32
  }
  func.func @transform_2(%arg0: i32) -> (i32, i32) {
    %c0_i32 = arith.constant 0 : i32
    %c0_i32_0 = arith.constant 0 : i32
    %c0_i32_1 = arith.constant 0 : i32
    return %c0_i32, %c0_i32_0 : i32, i32
  }
  func.func @transform_3(%arg0: i32) -> (i32, i32) {
    %c0_i32 = arith.constant 0 : i32
    %c0_i32_0 = arith.constant 0 : i32
    return %arg0, %c0_i32 : i32, i32
  }
}

</mosaic_0001>

<llo_original>
// kernel: tpu_custom_call.1
$region0: #{tpu_custom_call.1}
  #allocation0 [shape = 'u32[]', space=smem, size = 0x4, offset = 0x4, fixed_abs, tag = 'smem constant byte address 0x4 - core index']
  #allocation1 [shape = 'u32[144,128]{1,0:T(1,128)}', space=vmem, size = 0x12000, scoped, tag = 'internal scratch']
  %s0 = inlined_call_operand.vmem [shape: f32[64,4], index: 0, kind: input, shape index: {}]
  %s1 = inlined_call_operand.vmem [shape: bf16[4,384], index: 1, kind: input, shape index: {}]
  %s2 = inlined_call_operand.vmem [shape: f32[1,384], index: 2, kind: input, shape index: {}]
  %s3 = inlined_call_operand.hbm [shape: bf16[64,384], index: 3, kind: output, shape index: {}]
  %s4 = sld [smem:[#allocation0]]
  $region22: #{tpu_custom_call.1} parent=0
    _
  %s6 = ssub.s32 1, %s4
  %s7 = scalar_select 0, %s6, %s4
  $region1: #{tpu_custom_call.1} parent=0
    #allocation2 [shape = 'u8[49152]{0}', space=vmem, size = 0xc000, scoped, tag = 'output window, operand 0, single buffered']
    #allocation3 [shape = 's32[1]{0}', space=sflag, size = 0x4, scoped, tag = 'scoped memory for tpu_custom_call.1']
    %8 = vsyncpa [#allocation3], 0
    // Predicated region
    $region2: #{tpu_custom_call.1} parent=1 // pred_check
      _
    $region3: #{tpu_custom_call.1} parent=1 // pred_check_branch
      %10 = sbr.rel (0) target = $region5
    $region4: #{tpu_custom_call.1} parent=1 // pred_region
      _
    $region5: #{tpu_custom_call.1} parent=1 // pred_fallthru
      _
    // Predicated region
    $region6: #{tpu_custom_call.1} parent=1 // pred_check
      _
    $region7: #{tpu_custom_call.1} parent=1 // pred_check_branch
      %12 = sbr.rel (0) target = $region9
    $region8: #{tpu_custom_call.1} parent=1 // pred_region
      _
    $region9: #{tpu_custom_call.1} parent=1 // pred_fallthru
      _
    // Predicated region
    $region10: #{tpu_custom_call.1} parent=1 // pred_check
      _
    $region11: #{tpu_custom_call.1} parent=1 // pred_check_branch
      %14 = sbr.rel (0) target = $region13
    $region12: #{tpu_custom_call.1} parent=1 // pred_region
      _
    $region13: #{tpu_custom_call.1} parent=1 // pred_fallthru
      _
    %v16 = vld [vmem:[%s0] sm:$0xff]
    %v17 = vld [vmem:[%s0 + $0x8] sm:$0xff]
    %v18 = vld [vmem:[%s0 + $0x10] sm:$0xff]
    %v19 = vld [vmem:[%s0 + $0x18] sm:$0xff]
    %v20 = vld [vmem:[%s0 + $0x20] sm:$0xff]
    %v21 = vld [vmem:[%s0 + $0x28] sm:$0xff]
    %v22 = vld [vmem:[%s0 + $0x30] sm:$0xff]
    %v23 = vld [vmem:[%s0 + $0x38] sm:$0xff]
    %v24 = vpack.c.bf16 %v17, %v16
    %v25 = vpack.c.bf16 %v19, %v18
    %v26 = vpack.c.bf16 %v21, %v20
    %v27 = vpack.c.bf16 %v23, %v22
    %v28 = vld [vmem:[%s1] sm:$0x3f]
    %v29 = vld [vmem:[%s2] sm:$0x7]
    %v31 = vlaneseq
    %v32 = vshrl.u32 %v31, 7
    %v33 = vsub.s32 0, %v32
    %v34 = vrot.slane %v29, %v33
    %v35 = vlaneseq
    %v36 = vshrl.u32 %v35, 7
    %v37 = vsub.s32 1, %v36
    %v38 = vrot.slane %v29, %v37
    %v39 = vlaneseq
    %v40 = vshrl.u32 %v39, 7
    %v41 = vsub.s32 2, %v40
    %v42 = vrot.slane %v29, %v41
    %v47 = vcombine.high %v28, %v28
    %v49 = vunpack.c.l.s4 1983009808
    %v50 = vunpack.c.0.s8 %v49
    %v51 = vlaneseq
    %v52 = vshrl.u32 %v51, 7
    %v53 = vsub.s32 %v50, %v52
    %v54 = vrot.slane %v28, %v53
    %v56 = vunpack.c.l.s4 1983009808
    %v57 = vunpack.c.0.s8 %v56
    %v58 = vlaneseq
    %v59 = vshrl.u32 %v58, 7
    %v60 = vsub.s32 %v57, %v59
    %v61 = vrot.slane %v47, %v60
    %v62 = vcombine.high %v54, %v54
    %vm63 = vcmask 31744
    %v65 = vsel %vm63, %v24, 0
    %v68 = vsel %vm63, %v25, 0
    %v71 = vsel %vm63, %v26, 0
    %v74 = vsel %vm63, %v27, 0
    %vm76 = vcmask 1041408
    %v78 = vsel %vm76, %v54, 0
    %v81 = vsel %vm76, %v62, 0
    %v84 = vsel %vm76, %v61, 0
    %86 = vmatprep.subr.bf16.mxu0 %v81
    %87 = vmatpush1.bf16.msra.mxu0 %v78
    %88 = vmatprep.subr.bf16.mxu0 0
    %89 = vmatpush1.bf16.msra.mxu0 0
    %90 = vmatprep.subr.bf16.mxu0 0
    %91 = vmatpush1.bf16.msra.mxu0 0
    %92 = vmatprep.subr.bf16.mxu0 0
    %93 = vmatpush1.bf16.msra.mxu0 0
    %94 = vmatprep.subr.bf16.mxu0 0
    %95 = vmatpush1.bf16.msra.mxu0 0
    %96 = vmatprep.subr.bf16.mxu0 0
    %97 = vmatpush1.bf16.msra.mxu0 0
    %98 = vmatprep.subr.bf16.mxu0 0
    %99 = vmatpush1.bf16.msra.mxu0 0
    %100 = vmatprep.subr.bf16.mxu0 0
    %101 = vmatpush1.bf16.msra.mxu0 0
    %102 = vmatprep.subr.bf16.mxu0 0
    %103 = vmatpush1.bf16.msra.mxu0 0
    %104 = vmatprep.subr.bf16.mxu0 0
    %105 = vmatpush1.bf16.msra.mxu0 0
    %106 = vmatprep.subr.bf16.mxu0 0
    %107 = vmatpush1.bf16.msra.mxu0 0
    %108 = vmatprep.subr.bf16.mxu0 0
    %109 = vmatpush1.bf16.msra.mxu0 0
    %110 = vmatprep.subr.bf16.mxu0 0
    %111 = vmatpush1.bf16.msra.mxu0 0
    %112 = vmatprep.subr.bf16.mxu0 0
    %113 = vmatpush1.bf16.msra.mxu0 0
    %114 = vmatprep.subr.bf16.mxu0 0
    %115 = vmatpush1.bf16.msra.mxu0 0
    %116 = vmatprep.subr.bf16.mxu0 0
    %117 = vmatpush1.bf16.msra.mxu0 0
    %118 = vmatprep.mubr.bf16.mxu0 0
    %119 = vmatmul.mubr.bf16.gmra.mrb[0].mxu0 %v65
    %v120 = vpop.f32.mrb[0].mxu0
    %v121 = vadd.f32 %v34, %v120
    %v122 = vpop.f32.mrb[0].mxu0
    %v123 = vadd.f32 %v38, %v122
    %v124 = vpop.f32.mrb[0].mxu0
    %v125 = vadd.f32 %v34, %v124
    %v126 = vpop.f32.mrb[0].mxu0
    %v127 = vadd.f32 %v38, %v126
    %128 = vmatprep.mubr.bf16.mxu0 0
    %129 = vmatmul.mubr.bf16.gmra.mrb[0].mxu0 %v68
    %v130 = vpop.f32.mrb[0].mxu0
    %v131 = vadd.f32 %v34, %v130
    %v132 = vpop.f32.mrb[0].mxu0
    %v133 = vadd.f32 %v38, %v132
    %v134 = vpop.f32.mrb[0].mxu0
    %v135 = vadd.f32 %v34, %v134
    %v136 = vpop.f32.mrb[0].mxu0
    %v137 = vadd.f32 %v38, %v136
    %138 = vmatprep.mubr.bf16.mxu0 0
    %139 = vmatmul.mubr.bf16.gmra.mrb[0].mxu0 %v71
    %v140 = vpop.f32.mrb[0].mxu0
    %v141 = vadd.f32 %v34, %v140
    %v142 = vpop.f32.mrb[0].mxu0
    %v143 = vadd.f32 %v38, %v142
    %v144 = vpop.f32.mrb[0].mxu0
    %v145 = vadd.f32 %v34, %v144
    %v146 = vpop.f32.mrb[0].mxu0
    %v147 = vadd.f32 %v38, %v146
    %148 = vmatprep.mubr.bf16.mxu0 0
    %149 = vmatmul.mubr.bf16.gmra.mrb[0].mxu0 %v74
    %v150 = vpop.f32.mrb[0].mxu0
    %v151 = vadd.f32 %v34, %v150
    %v152 = vpop.f32.mrb[0].mxu0
    %v153 = vadd.f32 %v38, %v152
    %v154 = vpop.f32.mrb[0].mxu0
    %v155 = vadd.f32 %v34, %v154
    %v156 = vpop.f32.mrb[0].mxu0
    %v157 = vadd.f32 %v38, %v156
    %158 = vdwg.mxu0
    %159 = vmatprep.subr.bf16.mxu0 0
    %160 = vmatpush1.bf16.msra.mxu0 %v84
    %161 = vmatprep.subr.bf16.mxu0 0
    %162 = vmatpush1.bf16.msra.mxu0 0
    %163 = vmatprep.subr.bf16.mxu0 0
    %164 = vmatpush1.bf16.msra.mxu0 0
    %165 = vmatprep.subr.bf16.mxu0 0
    %166 = vmatpush1.bf16.msra.mxu0 0
    %167 = vmatprep.subr.bf16.mxu0 0
    %168 = vmatpush1.bf16.msra.mxu0 0
    %169 = vmatprep.subr.bf16.mxu0 0
    %170 = vmatpush1.bf16.msra.mxu0 0
    %171 = vmatprep.subr.bf16.mxu0 0
    %172 = vmatpush1.bf16.msra.mxu0 0
    %173 = vmatprep.subr.bf16.mxu0 0
    %174 = vmatpush1.bf16.msra.mxu0 0
    %175 = vmatprep.subr.bf16.mxu0 0
    %176 = vmatpush1.bf16.msra.mxu0 0
    %177 = vmatprep.subr.bf16.mxu0 0
    %178 = vmatpush1.bf16.msra.mxu0 0
    %179 = vmatprep.subr.bf16.mxu0 0
    %180 = vmatpush1.bf16.msra.mxu0 0
    %181 = vmatprep.subr.bf16.mxu0 0
    %182 = vmatpush1.bf16.msra.mxu0 0
    %183 = vmatprep.subr.bf16.mxu0 0
    %184 = vmatpush1.bf16.msra.mxu0 0
    %185 = vmatprep.subr.bf16.mxu0 0
    %186 = vmatpush1.bf16.msra.mxu0 0
    %187 = vmatprep.subr.bf16.mxu0 0
    %188 = vmatpush1.bf16.msra.mxu0 0
    %189 = vmatprep.subr.bf16.mxu0 0
    %190 = vmatpush1.bf16.msra.mxu0 0
    %191 = vmatprep.mubr.bf16.mxu0 0
    %192 = vmatmul.mubr.bf16.gmra.mrb[0].mxu0 %v65
    %v193 = vpop.f32.mrb[0].mxu0
    %v194 = vadd.f32 %v42, %v193
    %v195 = vpop.f32.mrb[0].mxu0
    %v196 = vpop.f32.mrb[0].mxu0
    %v197 = vadd.f32 %v42, %v196
    %v198 = vpop.f32.mrb[0].mxu0
    %199 = vmatprep.mubr.bf16.mxu0 0
    %200 = vmatmul.mubr.bf16.gmra.mrb[0].mxu0 %v68
    %v201 = vpop.f32.mrb[0].mxu0
    %v202 = vadd.f32 %v42, %v201
    %v203 = vpop.f32.mrb[0].mxu0
    %v204 = vpop.f32.mrb[0].mxu0
    %v205 = vadd.f32 %v42, %v204
    %v206 = vpop.f32.mrb[0].mxu0
    %207 = vmatprep.mubr.bf16.mxu0 0
    %208 = vmatmul.mubr.bf16.gmra.mrb[0].mxu0 %v71
    %v209 = vpop.f32.mrb[0].mxu0
    %v210 = vadd.f32 %v42, %v209
    %v211 = vpop.f32.mrb[0].mxu0
    %v212 = vpop.f32.mrb[0].mxu0
    %v213 = vadd.f32 %v42, %v212
    %v214 = vpop.f32.mrb[0].mxu0
    %215 = vmatprep.mubr.bf16.mxu0 0
    %216 = vmatmul.mubr.bf16.gmra.mrb[0].mxu0 %v74
    %v217 = vpop.f32.mrb[0].mxu0
    %v218 = vadd.f32 %v42, %v217
    %v219 = vpop.f32.mrb[0].mxu0
    %v220 = vpop.f32.mrb[0].mxu0
    %v221 = vadd.f32 %v42, %v220
    %v222 = vpop.f32.mrb[0].mxu0
    %223 = vdwg.mxu0
    %v224 = vpack.c.bf16 %v125, %v121
    %v225 = vpack.c.bf16 %v127, %v123
    %v226 = vpack.c.bf16 %v197, %v194
    %v227 = vpack.c.bf16 %v135, %v131
    %v228 = vpack.c.bf16 %v137, %v133
    %v229 = vpack.c.bf16 %v205, %v202
    %v230 = vpack.c.bf16 %v145, %v141
    %v231 = vpack.c.bf16 %v147, %v143
    %v232 = vpack.c.bf16 %v213, %v210
    %v233 = vpack.c.bf16 %v155, %v151
    %v234 = vpack.c.bf16 %v157, %v153
    %v235 = vpack.c.bf16 %v221, %v218
    %v248 = vunpack.c.l.b16 %v224
    %v249 = vunpack.c.l.b16 %v225
    %v250 = vunpack.c.l.b16 %v226
    %v251 = vunpack.c.h.b16 %v224
    %v252 = vunpack.c.h.b16 %v225
    %v253 = vunpack.c.h.b16 %v226
    %v254 = vunpack.c.l.b16 %v227
    %v255 = vunpack.c.l.b16 %v228
    %v256 = vunpack.c.l.b16 %v229
    %v257 = vunpack.c.h.b16 %v227
    %v258 = vunpack.c.h.b16 %v228
    %v259 = vunpack.c.h.b16 %v229
    %v260 = vunpack.c.l.b16 %v230
    %v261 = vunpack.c.l.b16 %v231
    %v262 = vunpack.c.l.b16 %v232
    %v263 = vunpack.c.h.b16 %v230
    %v264 = vunpack.c.h.b16 %v231
    %v265 = vunpack.c.h.b16 %v232
    %v266 = vunpack.c.l.b16 %v233
    %v267 = vunpack.c.l.b16 %v234
    %v268 = vunpack.c.l.b16 %v235
    %v269 = vunpack.c.h.b16 %v233
    %v270 = vunpack.c.h.b16 %v234
    %v271 = vunpack.c.h.b16 %v235
    %v272 = vpack.c.b16 %v249, %v248
    %v273 = vpack.c.b16 %v250, %v250
    %v274 = vpack.c.b16 %v252, %v251
    %v275 = vpack.c.b16 %v253, %v253
    %v276 = vpack.c.b16 %v255, %v254
    %v277 = vpack.c.b16 %v256, %v256
    %v278 = vpack.c.b16 %v258, %v257
    %v279 = vpack.c.b16 %v259, %v259
    %v280 = vpack.c.b16 %v261, %v260
    %v281 = vpack.c.b16 %v262, %v262
    %v282 = vpack.c.b16 %v264, %v263
    %v283 = vpack.c.b16 %v265, %v265
    %v284 = vpack.c.b16 %v267, %v266
    %v285 = vpack.c.b16 %v268, %v268
    %v286 = vpack.c.b16 %v270, %v269
    %v287 = vpack.c.b16 %v271, %v271
    %304 = vst [vmem:[#allocation2] sm:$0xff] %v272
    %305 = vst [vmem:[#allocation2 + $0x8] sm:$0xf] %v273
    %306 = vst [vmem:[#allocation2 + $0xc] sm:$0xff] %v274
    %307 = vst [vmem:[#allocation2 + $0x14] sm:$0xf] %v275
    %308 = vst [vmem:[#allocation2 + $0x18] sm:$0xff] %v276
    %309 = vst [vmem:[#allocation2 + $0x20] sm:$0xf] %v277
    %310 = vst [vmem:[#allocation2 + $0x24] sm:$0xff] %v278
    %311 = vst [vmem:[#allocation2 + $0x2c] sm:$0xf] %v279
    %312 = vst [vmem:[#allocation2 + $0x30] sm:$0xff] %v280
    %313 = vst [vmem:[#allocation2 + $0x38] sm:$0xf] %v281
    %314 = vst [vmem:[#allocation2 + $0x3c] sm:$0xff] %v282
    %315 = vst [vmem:[#allocation2 + $0x44] sm:$0xf] %v283
    %316 = vst [vmem:[#allocation2 + $0x48] sm:$0xff] %v284
    %317 = vst [vmem:[#allocation2 + $0x50] sm:$0xf] %v285
    %318 = vst [vmem:[#allocation2 + $0x54] sm:$0xff] %v286
    %319 = vst [vmem:[#allocation2 + $0x5c] sm:$0xf] %v287
    // Predicated region
    $region14: #{tpu_custom_call.1} parent=1 // pred_check
      _
    $region15: #{tpu_custom_call.1} parent=1 // pred_check_branch
      %321 = sbr.rel (0) target = $region17
    $region16: #{tpu_custom_call.1} parent=1 // pred_region
      %s323 = ssub.s32 1536, 1536
      %324 = vsyncadd [#allocation3], %s323
      %s325 = sshll.u32 [#allocation2], 4
      %s326 = int_to_ptr.vmem [resolvable:$true] %s325
      %331 = dma.vmem_to_hbm [thread:$0]  %s326, 1536, %s3, [#allocation3], 192, 192, 12
    $region17: #{tpu_custom_call.1} parent=1 // pred_fallthru
      _
    // Predicated region
    $region18: #{tpu_custom_call.1} parent=1 // pred_check
      _
    $region19: #{tpu_custom_call.1} parent=1 // pred_check_branch
      %333 = sbr.rel (0) target = $region21
    $region20: #{tpu_custom_call.1} parent=1 // pred_region
      %334 = dma.done [#allocation3], 1536
    $region21: #{tpu_custom_call.1} parent=1 // pred_fallthru
      _
    %335 = vsyncpa [#allocation3], 1

</llo_original>
